<compile_context>
chip_gen: v7x
topology: tpu7x:2x2x1
jax: 0.10.0
libtpu: 0.0.40
codegen_flags: <defaults>
</compile_context>

<pallas_src>
import jax
import jax.numpy as jnp
from jax.experimental import pallas as pl
from jax.experimental.pallas import tpu as pltpu

INPUT_SIZE = 2
HIDDEN = 50
N_ACTIONS = 2

LANE = 128                 # 128-lane block: activation slab / per-gate block
G_WIDTH = 4 * LANE         # gate slab columns: [ r | z | i_n | h_n ]
PI_LANE = LANE - 3         # lane 125: pi0 (lane 126: pi1)
C_LANE = LANE - 1          # lane 127: critic value (also the bias lane of x)
MAX_TILE = 512             # batch tile cap (step overhead vs padding waste)


def _round_up(x, m):
    return (x + m - 1) // m * m


# ----------------------------------------------------------------------------
# Kernel
# ----------------------------------------------------------------------------
def net_kernel(x_ref, wg_ref, wh_ref, out_ref):
    bt = x_ref.shape[0]
    x = x_ref[...]                                                   # (bt, 128) f32
    lane = jax.lax.broadcasted_iota(jnp.int32, (bt, LANE), 1)

    # Fused GRU gate matmul: one bf16 MXU pass -> all four 128-lane gate blocks
    #   [0:128]   = W_hr h + W_ir s + b_r        (r pre-activation)
    #   [128:256] = W_hz h + W_iz s + b_z        (z pre-activation)
    #   [256:384] = W_in s + b_in
    #   [384:512] = W_hn h + b_hn
    g = jnp.dot(x.astype(jnp.bfloat16), wg_ref[...],
                preferred_element_type=jnp.float32)                  # (bt, 512)

    r = jax.nn.sigmoid(g[:, 0:LANE])
    z = jax.nn.sigmoid(g[:, LANE:2 * LANE])
    n = jnp.tanh(g[:, 2 * LANE:3 * LANE] + r * g[:, 3 * LANE:4 * LANE])
    # h occupies lanes [0:HIDDEN] of x; mask off the s / zero / bias lanes.
    h_prev = jnp.where(lane < HIDDEN, x, 0.0)
    h_new = (1.0 - z) * n + z * h_prev          # lanes >= HIDDEN stay exactly 0

    # Fused actor+critic head.  Replace lane 127 (which is exactly 0 in h_new)
    # with 1.0 so row 127 of W_HEADS supplies the head biases.
    h_head = jnp.where(lane == C_LANE, 1.0, h_new)
    head = jnp.dot(h_head.astype(jnp.bfloat16), wh_ref[...],
                   preferred_element_type=jnp.float32)               # (bt, 128)
    # Lanes 125/126 hold (l0 - l1, l1 - l0): sigmoid of these IS the exact
    # 2-class softmax.  Lane 127 is the critic; every other lane is 0.
    head = jnp.where((lane >= PI_LANE) & (lane < C_LANE),
                     jax.nn.sigmoid(head), head)

    # h_new is 0 in lanes 125..127 and head is 0 in lanes 0..124, so a single
    # add produces the full lane-dense output slab in one unmasked store.
    out_ref[...] = h_new + head


# ----------------------------------------------------------------------------
# Host-side parameter init / packing (done once, outside the step)
# ----------------------------------------------------------------------------
def make_net_params(key):
    """Deterministic init, PyTorch-style uniform(-1/sqrt(fan), 1/sqrt(fan))."""
    ks = jax.random.split(key, 8)
    std = 1.0 / jnp.sqrt(HIDDEN)

    def u(k, shape):
        return jax.random.uniform(k, shape, jnp.float32, -std, std)

    return dict(
        # GRUCell: weight_ih (3H, in), weight_hh (3H, H), bias_ih, bias_hh
        w_ih=u(ks[0], (3 * HIDDEN, INPUT_SIZE)),
        w_hh=u(ks[1], (3 * HIDDEN, HIDDEN)),
        b_ih=u(ks[2], (3 * HIDDEN,)),
        b_hh=u(ks[3], (3 * HIDDEN,)),
        # actor Linear(50, 2) / critic Linear(50, 1)
        w_act=u(ks[4], (N_ACTIONS, HIDDEN)),
        b_act=u(ks[5], (N_ACTIONS,)),
        w_cri=u(ks[6], (1, HIDDEN)),
        b_cri=u(ks[7], (1,)),
    )


def pack_params(params):
    H = HIDDEN
    w_ih_t = params["w_ih"].T            # (2, 150): cols [0:H]=r [H:2H]=z [2H:3H]=n
    w_hh_t = params["w_hh"].T            # (50, 150)
    b_ih = params["b_ih"]
    b_hh = params["b_hh"]

    # ---- fused GRU gate slab (128, 512): rows match x lane layout ----
    wg = jnp.zeros((LANE, G_WIDTH), jnp.float32)
    # hidden-state rows (x lanes 0:H)
    wg = wg.at[0:H, 0:H].set(w_hh_t[:, 0:H])                              # r
    wg = wg.at[0:H, LANE:LANE + H].set(w_hh_t[:, H:2 * H])                # z
    wg = wg.at[0:H, 3 * LANE:3 * LANE + H].set(w_hh_t[:, 2 * H:3 * H])    # h_n
    # input rows (x lanes H:H+2)
    wg = wg.at[H:H + INPUT_SIZE, 0:H].set(w_ih_t[:, 0:H])                 # r
    wg = wg.at[H:H + INPUT_SIZE, LANE:LANE + H].set(w_ih_t[:, H:2 * H])   # z
    wg = wg.at[H:H + INPUT_SIZE, 2 * LANE:2 * LANE + H].set(w_ih_t[:, 2 * H:3 * H])  # i_n
    # biases in row 127 (picked up by the constant 1.0 bias lane of x)
    wg = wg.at[LANE - 1, 0:H].set(b_ih[0:H] + b_hh[0:H])                  # r
    wg = wg.at[LANE - 1, LANE:LANE + H].set(b_ih[H:2 * H] + b_hh[H:2 * H])  # z
    wg = wg.at[LANE - 1, 2 * LANE:2 * LANE + H].set(b_ih[2 * H:3 * H])    # i_n
    wg = wg.at[LANE - 1, 3 * LANE:3 * LANE + H].set(b_hh[2 * H:3 * H])    # h_n

    # ---- fused actor+critic head slab (128, 128) ----
    wa_t = params["w_act"].T             # (50, 2)
    wc_t = params["w_cri"].T             # (50, 1)
    d = wa_t[:, 0] - wa_t[:, 1]          # logit-difference column -> sigmoid softmax
    db = params["b_act"][0] - params["b_act"][1]
    wh = jnp.zeros((LANE, LANE), jnp.float32)
    wh = wh.at[0:H, PI_LANE].set(d)
    wh = wh.at[0:H, PI_LANE + 1].set(-d)
    wh = wh.at[0:H, C_LANE].set(wc_t[:, 0])
    wh = wh.at[LANE - 1, PI_LANE].set(db)
    wh = wh.at[LANE - 1, PI_LANE + 1].set(-db)
    wh = wh.at[LANE - 1, C_LANE].set(params["b_cri"][0])

    # bf16 weights: half the DMA bytes, native MXU path; accumulation stays f32.
    return wg.astype(jnp.bfloat16), wh.astype(jnp.bfloat16)


# ----------------------------------------------------------------------------
# Forward wrapper
# ----------------------------------------------------------------------------
def net_forward(s, h, wg, wh):
    B = s.shape[0]
    B_pad = _round_up(B, 8)              # f32 sublane tile
    if B_pad > MAX_TILE:
        # Tile the batch; force an EVEN tile count so v7x can shard the
        # "parallel" axis across its two TensorCores.
        nt = pl.cdiv(B_pad, MAX_TILE)
        if nt % 2:
            nt += 1
        bt = _round_up(pl.cdiv(B_pad, nt), 8)
        B_pad = nt * bt
    else:
        bt = B_pad

    # Single fused concatenate (+ pad) builds the lane-aligned activation slab:
    #   lanes [0:H]=h, [H:H+2]=s, [H+2:127]=0, lane 127 = 1.0 (bias pickup).
    # Padded batch rows are all-zero; they produce benign values that the
    # wrapper never returns (sliced off with [:B]).
    x = jnp.concatenate(
        [
            h.astype(jnp.float32),
            s.astype(jnp.float32),
            jnp.zeros((B, LANE - HIDDEN - INPUT_SIZE - 1), jnp.float32),
            jnp.ones((B, 1), jnp.float32),
        ],
        axis=1,
    )
    if B_pad > B:
        x = jnp.pad(x, ((0, B_pad - B), (0, 0)))

    grid = (B_pad // bt,)
    out = pl.pallas_call(
        net_kernel,
        grid=grid,
        in_specs=[
            pl.BlockSpec((bt, LANE), lambda i: (i, 0)),
            pl.BlockSpec((LANE, G_WIDTH), lambda i: (0, 0)),
            pl.BlockSpec((LANE, LANE), lambda i: (0, 0)),
        ],
        out_specs=pl.BlockSpec((bt, LANE), lambda i: (i, 0)),
        out_shape=jax.ShapeDtypeStruct((B_pad, LANE), jnp.float32),
        compiler_params=pltpu.CompilerParams(
            dimension_semantics=("parallel",)),
    )(x, wg, wh)

    h_new = out[:B, 0:HIDDEN]
    pi = out[:B, PI_LANE:PI_LANE + N_ACTIONS]
    c = out[:B, C_LANE:C_LANE + 1]
    return h_new, c, pi


# ----------------------------------------------------------------------------
# Pure-JAX reference (PyTorch GRUCell semantics) for validation
# ----------------------------------------------------------------------------
def net_reference(s, h, params):
    gi = s @ params["w_ih"].T + params["b_ih"]
    gh = h @ params["w_hh"].T + params["b_hh"]
    i_r, i_z, i_n = jnp.split(gi, 3, axis=1)
    h_r, h_z, h_n = jnp.split(gh, 3, axis=1)
    r = jax.nn.sigmoid(i_r + h_r)
    z = jax.nn.sigmoid(i_z + h_z)
    n = jnp.tanh(i_n + r * h_n)
    h_new = (1.0 - z) * n + z * h
    c = h_new @ params["w_cri"].T + params["b_cri"]
    pi = jax.nn.softmax(h_new @ params["w_act"].T + params["b_act"], axis=1)
    return h_new, c, pi


if __name__ == "__main__":
    key = jax.random.PRNGKey(0)
    k_params, k_s, k_h = jax.random.split(key, 3)

    B = 4
    params = make_net_params(k_params)
    wg, wh = pack_params(params)                       # done once
    s = jax.random.normal(k_s, (B, INPUT_SIZE), jnp.float32)
    h0 = jax.random.normal(k_h, (B, HIDDEN), jnp.float32)

    fwd = jax.jit(net_forward)                         # fuse pack + slice ops
    h_new, c, pi = fwd(s, h0, wg, wh)
    jax.block_until_ready((h_new, c, pi))

    # shape checks
    assert h_new.shape == (B, HIDDEN)
    assert c.shape == (B, 1)
    assert pi.shape == (B, N_ACTIONS)

    # softmax rows sum to 1
    assert bool(jnp.all(jnp.abs(jnp.sum(pi, axis=1) - 1.0) < 1e-5))

    # numerical check against pure-JAX f32 reference
    # (2e-2 tolerance is for the bf16-weight path; the f32 math is exact)
    h_ref, c_ref, pi_ref = net_reference(s, h0, params)
    assert bool(jnp.allclose(h_new, h_ref, rtol=2e-2, atol=2e-2))
    assert bool(jnp.allclose(c, c_ref, rtol=2e-2, atol=2e-2))
    assert bool(jnp.allclose(pi, pi_ref, rtol=2e-2, atol=2e-2))

    print("KERNEL_OK")
</pallas_src>

<mosaic_0001>
module attributes {stable_mosaic.version = 11 : i64} {
  func.func @net_kernel(%arg0: i32, %arg1: memref<8x128xf32, #tpu.memory_space<vmem>>, %arg2: memref<128x512xbf16, #tpu.memory_space<vmem>>, %arg3: memref<128x128xbf16, #tpu.memory_space<vmem>>, %arg4: memref<8x128xf32, #tpu.memory_space<vmem>>) attributes {dimension_semantics = [#tpu.dimension_semantics<parallel>], iteration_bounds = array<i64: 1>, scalar_prefetch = 0 : i64, scratch_operands = 0 : i64, tpu.core_type = #tpu.core_type<tc>, window_params = [{transform_indices = @transform_0, window_bounds = array<i64: 8, 128>}, {pipeline_mode = #tpu.pipeline_mode<synchronous>, transform_indices = @transform_1, window_bounds = array<i64: 128, 512>}, {pipeline_mode = #tpu.pipeline_mode<synchronous>, transform_indices = @transform_2, window_bounds = array<i64: 128, 128>}, {transform_indices = @transform_3, window_bounds = array<i64: 8, 128>}]} {
    %c0 = arith.constant 0 : index
    %c0_0 = arith.constant 0 : index
    %0 = vector.load %arg1[%c0, %c0_0] : memref<8x128xf32, #tpu.memory_space<vmem>>, vector<8x128xf32>
    %1 = tpu.iota {dimensions = array<i32: 1>} : vector<8x128xi32>
    %2 = arith.truncf %0 : vector<8x128xf32> to vector<8x128xbf16>
    %c0_1 = arith.constant 0 : index
    %c0_2 = arith.constant 0 : index
    %3 = vector.load %arg2[%c0_1, %c0_2] : memref<128x512xbf16, #tpu.memory_space<vmem>>, vector<128x512xbf16>
    %cst = arith.constant dense<0.000000e+00> : vector<8x512xf32>
    %4 = tpu.matmul %2, %3, %cst {dimension_numbers = #tpu.dot_dimension_numbers<[1], [0], [0], [1], [0, 0, 1, 1], [], []>} : vector<8x128xbf16>, vector<128x512xbf16>, vector<8x512xf32> -> vector<8x512xf32>
    %5 = vector.extract_strided_slice %4 {offsets = [0, 0], sizes = [8, 128], strides = [1, 1]} : vector<8x512xf32> to vector<8x128xf32>
    %6 = arith.negf %5 : vector<8x128xf32>
    %7 = math.exp %6 : vector<8x128xf32>
    %cst_3 = arith.constant 1.000000e+00 : f32
    %8 = vector.broadcast %cst_3 : f32 to vector<8x128xf32>
    %9 = arith.addf %8, %7 : vector<8x128xf32>
    %10 = arith.divf %8, %9 : vector<8x128xf32>
    %11 = vector.extract_strided_slice %4 {offsets = [0, 128], sizes = [8, 128], strides = [1, 1]} : vector<8x512xf32> to vector<8x128xf32>
    %12 = arith.negf %11 : vector<8x128xf32>
    %13 = math.exp %12 : vector<8x128xf32>
    %cst_4 = arith.constant 1.000000e+00 : f32
    %14 = vector.broadcast %cst_4 : f32 to vector<8x128xf32>
    %15 = arith.addf %14, %13 : vector<8x128xf32>
    %16 = arith.divf %14, %15 : vector<8x128xf32>
    %17 = vector.extract_strided_slice %4 {offsets = [0, 256], sizes = [8, 128], strides = [1, 1]} : vector<8x512xf32> to vector<8x128xf32>
    %18 = vector.extract_strided_slice %4 {offsets = [0, 384], sizes = [8, 128], strides = [1, 1]} : vector<8x512xf32> to vector<8x128xf32>
    %19 = arith.mulf %10, %18 : vector<8x128xf32>
    %20 = arith.addf %17, %19 : vector<8x128xf32>
    %21 = math.tanh %20 : vector<8x128xf32>
    %c50_i32 = arith.constant 50 : i32
    %22 = vector.broadcast %c50_i32 : i32 to vector<8x128xi32>
    %23 = arith.cmpi slt, %1, %22 : vector<8x128xi32>
    %cst_5 = arith.constant 0.000000e+00 : f32
    %24 = vector.broadcast %cst_5 : f32 to vector<8x128xf32>
    %25 = arith.select %23, %0, %24 : vector<8x128xi1>, vector<8x128xf32>
    %cst_6 = arith.constant 1.000000e+00 : f32
    %26 = vector.broadcast %cst_6 : f32 to vector<8x128xf32>
    %27 = arith.subf %26, %16 : vector<8x128xf32>
    %28 = arith.mulf %27, %21 : vector<8x128xf32>
    %29 = arith.mulf %16, %25 : vector<8x128xf32>
    %30 = arith.addf %28, %29 : vector<8x128xf32>
    %c127_i32 = arith.constant 127 : i32
    %31 = vector.broadcast %c127_i32 : i32 to vector<8x128xi32>
    %32 = arith.cmpi eq, %1, %31 : vector<8x128xi32>
    %cst_7 = arith.constant 1.000000e+00 : f32
    %33 = vector.broadcast %cst_7 : f32 to vector<8x128xf32>
    %34 = arith.select %32, %33, %30 : vector<8x128xi1>, vector<8x128xf32>
    %35 = arith.truncf %34 : vector<8x128xf32> to vector<8x128xbf16>
    %c0_8 = arith.constant 0 : index
    %c0_9 = arith.constant 0 : index
    %36 = vector.load %arg3[%c0_8, %c0_9] : memref<128x128xbf16, #tpu.memory_space<vmem>>, vector<128x128xbf16>
    %cst_10 = arith.constant dense<0.000000e+00> : vector<8x128xf32>
    %37 = tpu.matmul %35, %36, %cst_10 {dimension_numbers = #tpu.dot_dimension_numbers<[1], [0], [0], [1], [0, 0, 1, 1], [], []>} : vector<8x128xbf16>, vector<128x128xbf16>, vector<8x128xf32> -> vector<8x128xf32>
    %c125_i32 = arith.constant 125 : i32
    %38 = vector.broadcast %c125_i32 : i32 to vector<8x128xi32>
    %39 = arith.cmpi sge, %1, %38 : vector<8x128xi32>
    %c127_i32_11 = arith.constant 127 : i32
    %40 = vector.broadcast %c127_i32_11 : i32 to vector<8x128xi32>
    %41 = arith.cmpi slt, %1, %40 : vector<8x128xi32>
    %42 = arith.andi %39, %41 : vector<8x128xi1>
    %43 = arith.negf %37 : vector<8x128xf32>
    %44 = math.exp %43 : vector<8x128xf32>
    %cst_12 = arith.constant 1.000000e+00 : f32
    %45 = vector.broadcast %cst_12 : f32 to vector<8x128xf32>
    %46 = arith.addf %45, %44 : vector<8x128xf32>
    %47 = arith.divf %45, %46 : vector<8x128xf32>
    %48 = arith.select %42, %47, %37 : vector<8x128xi1>, vector<8x128xf32>
    %49 = arith.addf %30, %48 : vector<8x128xf32>
    %c0_13 = arith.constant 0 : index
    %c0_14 = arith.constant 0 : index
    %50 = vector.load %arg4[%c0_13, %c0_14] : memref<8x128xf32, #tpu.memory_space<vmem>>, vector<8x128xf32>
    tpu.vector_store %arg4[%c0_13, %c0_14], %49 {strides = array<i32>} : memref<8x128xf32, #tpu.memory_space<vmem>>, vector<8x128xf32>,
    return
  }
  func.func @transform_0(%arg0: i32) -> (i32, i32) {
    %c0_i32 = arith.constant 0 : i32
    %c0_i32_0 = arith.constant 0 : i32
    return %arg0, %c0_i32 : i32, i32
  }
  func.func @transform_1(%arg0: i32) -> (i32, i32) {
    %c0_i32 = arith.constant 0 : i32
    %c0_i32_0 = arith.constant 0 : i32
    %c0_i32_1 = arith.constant 0 : i32
    return %c0_i32, %c0_i32_0 : i32, i32
  }
  func.func @transform_2(%arg0: i32) -> (i32, i32) {
    %c0_i32 = arith.constant 0 : i32
    %c0_i32_0 = arith.constant 0 : i32
    %c0_i32_1 = arith.constant 0 : i32
    return %c0_i32, %c0_i32_0 : i32, i32
  }
  func.func @transform_3(%arg0: i32) -> (i32, i32) {
    %c0_i32 = arith.constant 0 : i32
    %c0_i32_0 = arith.constant 0 : i32
    return %arg0, %c0_i32 : i32, i32
  }
}

</mosaic_0001>

<llo_original>
// kernel: net_forward.1
$region0: #{net_forward.1}
  #allocation0 [shape = 'u32[]', space=smem, size = 0x4, offset = 0x4, fixed_abs, tag = 'smem constant byte address 0x4 - core index']
  #allocation1 [shape = 'u32[144,128]{1,0:T(1,128)}', space=vmem, size = 0x12000, scoped, tag = 'internal scratch']
  %s0 = inlined_call_operand.vmem [shape: f32[8,128], index: 0, kind: input, shape index: {}]
  %s1 = inlined_call_operand.hbm [shape: bf16[128,512], index: 1, kind: input, shape index: {}]
  %s2 = inlined_call_operand.hbm [shape: bf16[128,128], index: 2, kind: input, shape index: {}]
  %s3 = inlined_call_operand.vmem [shape: f32[8,128], index: 3, kind: output, shape index: {}]
  %s4 = sld [smem:[#allocation0]]
  $region30: #{net_forward.1} parent=0
    _
  %s6 = ssub.s32 1, %s4
  %s7 = scalar_select 0, %s6, %s4
  $region1: #{net_forward.1} parent=0
    #allocation2 [shape = 'u8[131072]{0}', space=vmem, size = 0x20000, scoped, tag = 'input window, operand 1, single buffered']
    #allocation3 [shape = 's32[1]{0}', space=sflag, size = 0x4, scoped, tag = 'scoped memory for net_forward.1']
    #allocation4 [shape = 'u8[32768]{0}', space=vmem, size = 0x8000, scoped, tag = 'input window, operand 2, single buffered']
    #allocation5 [shape = 's32[1]{0}', space=sflag, size = 0x4, scoped, tag = 'scoped memory for net_forward.1']
    %8 = vsyncpa [#allocation3], 0
    %9 = vsyncpa [#allocation5], 0
    // Predicated region
    $region2: #{net_forward.1} parent=1 // pred_check
      _
    $region3: #{net_forward.1} parent=1 // pred_check_branch
      %11 = sbr.rel (0) target = $region5
    $region4: #{net_forward.1} parent=1 // pred_region
      _
    $region5: #{net_forward.1} parent=1 // pred_fallthru
      _
    // Predicated region
    $region6: #{net_forward.1} parent=1 // pred_check
      _
    $region7: #{net_forward.1} parent=1 // pred_check_branch
      %13 = sbr.rel (0) target = $region9
    $region8: #{net_forward.1} parent=1 // pred_region
      %s15 = ssub.s32 4096, 4096
      %16 = vsyncadd [#allocation3], %s15
      %s17 = sshll.u32 [#allocation2], 4
      %s18 = int_to_ptr.vmem [resolvable:$true] %s17
      %23 = dma.hbm_to_vmem [thread:$0]  %s1, 4096, %s18, [#allocation3], 256, 256, 16
    $region9: #{net_forward.1} parent=1 // pred_fallthru
      _
    // Predicated region
    $region10: #{net_forward.1} parent=1 // pred_check
      _
    $region11: #{net_forward.1} parent=1 // pred_check_branch
      %25 = sbr.rel (0) target = $region13
    $region12: #{net_forward.1} parent=1 // pred_region
      %s27 = ssub.s32 1024, 1024
      %28 = vsyncadd [#allocation5], %s27
      %s29 = sshll.u32 [#allocation4], 4
      %s30 = int_to_ptr.vmem [resolvable:$true] %s29
      %35 = dma.hbm_to_vmem [thread:$0]  %s2, 1024, %s30, [#allocation5], 64, 64, 4
    $region13: #{net_forward.1} parent=1 // pred_fallthru
      _
    // Predicated region
    $region14: #{net_forward.1} parent=1 // pred_check
      _
    $region15: #{net_forward.1} parent=1 // pred_check_branch
      %37 = sbr.rel (0) target = $region17
    $region16: #{net_forward.1} parent=1 // pred_region
      %38 = dma.done [#allocation3], 4096
    $region17: #{net_forward.1} parent=1 // pred_fallthru
      _
    // Predicated region
    $region18: #{net_forward.1} parent=1 // pred_check
      _
    $region19: #{net_forward.1} parent=1 // pred_check_branch
      %40 = sbr.rel (0) target = $region21
    $region20: #{net_forward.1} parent=1 // pred_region
      %41 = dma.done [#allocation5], 1024
    $region21: #{net_forward.1} parent=1 // pred_fallthru
      _
    %v43 = vld [vmem:[%s0] sm:$0xff]
    %v44 = vlaneseq
    %v45 = vand.u32 %v44, 127
    %v46 = vpack.c.bf16 %v43, %v43
    %v47 = vld [vmem:[#allocation2] sm:$0xff]
    %v48 = vld [vmem:[#allocation2 + $0x8] sm:$0xff]
    %v49 = vld [vmem:[#allocation2 + $0x10] sm:$0xff]
    %v50 = vld [vmem:[#allocation2 + $0x18] sm:$0xff]
    %v51 = vld [vmem:[#allocation2 + $0x20] sm:$0xff]
    %v52 = vld [vmem:[#allocation2 + $0x28] sm:$0xff]
    %v53 = vld [vmem:[#allocation2 + $0x30] sm:$0xff]
    %v54 = vld [vmem:[#allocation2 + $0x38] sm:$0xff]
    %v55 = vld [vmem:[#allocation2 + $0x40] sm:$0xff]
    %v56 = vld [vmem:[#allocation2 + $0x48] sm:$0xff]
    %v57 = vld [vmem:[#allocation2 + $0x50] sm:$0xff]
    %v58 = vld [vmem:[#allocation2 + $0x58] sm:$0xff]
    %v59 = vld [vmem:[#allocation2 + $0x60] sm:$0xff]
    %v60 = vld [vmem:[#allocation2 + $0x68] sm:$0xff]
    %v61 = vld [vmem:[#allocation2 + $0x70] sm:$0xff]
    %v62 = vld [vmem:[#allocation2 + $0x78] sm:$0xff]
    %v63 = vld [vmem:[#allocation2 + $0x80] sm:$0xff]
    %v64 = vld [vmem:[#allocation2 + $0x88] sm:$0xff]
    %v65 = vld [vmem:[#allocation2 + $0x90] sm:$0xff]
    %v66 = vld [vmem:[#allocation2 + $0x98] sm:$0xff]
    %v67 = vld [vmem:[#allocation2 + $0xa0] sm:$0xff]
    %v68 = vld [vmem:[#allocation2 + $0xa8] sm:$0xff]
    %v69 = vld [vmem:[#allocation2 + $0xb0] sm:$0xff]
    %v70 = vld [vmem:[#allocation2 + $0xb8] sm:$0xff]
    %v71 = vld [vmem:[#allocation2 + $0xc0] sm:$0xff]
    %v72 = vld [vmem:[#allocation2 + $0xc8] sm:$0xff]
    %v73 = vld [vmem:[#allocation2 + $0xd0] sm:$0xff]
    %v74 = vld [vmem:[#allocation2 + $0xd8] sm:$0xff]
    %v75 = vld [vmem:[#allocation2 + $0xe0] sm:$0xff]
    %v76 = vld [vmem:[#allocation2 + $0xe8] sm:$0xff]
    %v77 = vld [vmem:[#allocation2 + $0xf0] sm:$0xff]
    %v78 = vld [vmem:[#allocation2 + $0xf8] sm:$0xff]
    %v111 = vunpack.c.l.b16 %v47
    %v112 = vunpack.c.h.b16 %v47
    %v113 = vunpack.c.l.b16 %v48
    %v114 = vunpack.c.h.b16 %v48
    %v115 = vunpack.c.l.b16 %v49
    %v116 = vunpack.c.h.b16 %v49
    %v117 = vunpack.c.l.b16 %v50
    %v118 = vunpack.c.h.b16 %v50
    %v119 = vunpack.c.l.b16 %v51
    %v120 = vunpack.c.h.b16 %v51
    %v121 = vunpack.c.l.b16 %v52
    %v122 = vunpack.c.h.b16 %v52
    %v123 = vunpack.c.l.b16 %v53
    %v124 = vunpack.c.h.b16 %v53
    %v125 = vunpack.c.l.b16 %v54
    %v126 = vunpack.c.h.b16 %v54
    %v127 = vunpack.c.l.b16 %v55
    %v128 = vunpack.c.h.b16 %v55
    %v129 = vunpack.c.l.b16 %v56
    %v130 = vunpack.c.h.b16 %v56
    %v131 = vunpack.c.l.b16 %v57
    %v132 = vunpack.c.h.b16 %v57
    %v133 = vunpack.c.l.b16 %v58
    %v134 = vunpack.c.h.b16 %v58
    %v135 = vunpack.c.l.b16 %v59
    %v136 = vunpack.c.h.b16 %v59
    %v137 = vunpack.c.l.b16 %v60
    %v138 = vunpack.c.h.b16 %v60
    %v139 = vunpack.c.l.b16 %v61
    %v140 = vunpack.c.h.b16 %v61
    %v141 = vunpack.c.l.b16 %v62
    %v142 = vunpack.c.h.b16 %v62
    %v143 = vunpack.c.l.b16 %v63
    %v144 = vunpack.c.h.b16 %v63
    %v145 = vunpack.c.l.b16 %v64
    %v146 = vunpack.c.h.b16 %v64
    %v147 = vunpack.c.l.b16 %v65
    %v148 = vunpack.c.h.b16 %v65
    %v149 = vunpack.c.l.b16 %v66
    %v150 = vunpack.c.h.b16 %v66
    %v151 = vunpack.c.l.b16 %v67
    %v152 = vunpack.c.h.b16 %v67
    %v153 = vunpack.c.l.b16 %v68
    %v154 = vunpack.c.h.b16 %v68
    %v155 = vunpack.c.l.b16 %v69
    %v156 = vunpack.c.h.b16 %v69
    %v157 = vunpack.c.l.b16 %v70
    %v158 = vunpack.c.h.b16 %v70
    %v159 = vunpack.c.l.b16 %v71
    %v160 = vunpack.c.h.b16 %v71
    %v161 = vunpack.c.l.b16 %v72
    %v162 = vunpack.c.h.b16 %v72
    %v163 = vunpack.c.l.b16 %v73
    %v164 = vunpack.c.h.b16 %v73
    %v165 = vunpack.c.l.b16 %v74
    %v166 = vunpack.c.h.b16 %v74
    %v167 = vunpack.c.l.b16 %v75
    %v168 = vunpack.c.h.b16 %v75
    %v169 = vunpack.c.l.b16 %v76
    %v170 = vunpack.c.h.b16 %v76
    %v171 = vunpack.c.l.b16 %v77
    %v172 = vunpack.c.h.b16 %v77
    %v173 = vunpack.c.l.b16 %v78
    %v174 = vunpack.c.h.b16 %v78
    %v175 = vpack.c.b16 %v115, %v111
    %v176 = vpack.c.b16 %v116, %v112
    %v177 = vpack.c.b16 %v117, %v113
    %v178 = vpack.c.b16 %v118, %v114
    %v179 = vpack.c.b16 %v123, %v119
    %v180 = vpack.c.b16 %v124, %v120
    %v181 = vpack.c.b16 %v125, %v121
    %v182 = vpack.c.b16 %v126, %v122
    %v183 = vpack.c.b16 %v131, %v127
    %v184 = vpack.c.b16 %v132, %v128
    %v185 = vpack.c.b16 %v133, %v129
    %v186 = vpack.c.b16 %v134, %v130
    %v187 = vpack.c.b16 %v139, %v135
    %v188 = vpack.c.b16 %v140, %v136
    %v189 = vpack.c.b16 %v141, %v137
    %v190 = vpack.c.b16 %v142, %v138
    %v191 = vpack.c.b16 %v147, %v143
    %v192 = vpack.c.b16 %v148, %v144
    %v193 = vpack.c.b16 %v149, %v145
    %v194 = vpack.c.b16 %v150, %v146
    %v195 = vpack.c.b16 %v155, %v151
    %v196 = vpack.c.b16 %v156, %v152
    %v197 = vpack.c.b16 %v157, %v153
    %v198 = vpack.c.b16 %v158, %v154
    %v199 = vpack.c.b16 %v163, %v159
    %v200 = vpack.c.b16 %v164, %v160
    %v201 = vpack.c.b16 %v165, %v161
    %v202 = vpack.c.b16 %v166, %v162
    %v203 = vpack.c.b16 %v171, %v167
    %v204 = vpack.c.b16 %v172, %v168
    %v205 = vpack.c.b16 %v173, %v169
    %v206 = vpack.c.b16 %v174, %v170
    %239 = vmatprep.subr.bf16.mxu0 %v176
    %240 = vmatpush1.bf16.msra.mxu0 %v175
    %241 = vmatprep.subr.bf16.mxu0 %v180
    %242 = vmatpush1.bf16.msra.mxu0 %v179
    %243 = vmatprep.subr.bf16.mxu0 %v184
    %244 = vmatpush1.bf16.msra.mxu0 %v183
    %245 = vmatprep.subr.bf16.mxu0 %v188
    %246 = vmatpush1.bf16.msra.mxu0 %v187
    %247 = vmatprep.subr.bf16.mxu0 %v192
    %248 = vmatpush1.bf16.msra.mxu0 %v191
    %249 = vmatprep.subr.bf16.mxu0 %v196
    %250 = vmatpush1.bf16.msra.mxu0 %v195
    %251 = vmatprep.subr.bf16.mxu0 %v200
    %252 = vmatpush1.bf16.msra.mxu0 %v199
    %253 = vmatprep.subr.bf16.mxu0 %v204
    %254 = vmatpush1.bf16.msra.mxu0 %v203
    %255 = vmatprep.subr.bf16.mxu0 0
    %256 = vmatpush1.bf16.msra.mxu0 0
    %257 = vmatprep.subr.bf16.mxu0 0
    %258 = vmatpush1.bf16.msra.mxu0 0
    %259 = vmatprep.subr.bf16.mxu0 0
    %260 = vmatpush1.bf16.msra.mxu0 0
    %261 = vmatprep.subr.bf16.mxu0 0
    %262 = vmatpush1.bf16.msra.mxu0 0
    %263 = vmatprep.subr.bf16.mxu0 0
    %264 = vmatpush1.bf16.msra.mxu0 0
    %265 = vmatprep.subr.bf16.mxu0 0
    %266 = vmatpush1.bf16.msra.mxu0 0
    %267 = vmatprep.subr.bf16.mxu0 0
    %268 = vmatpush1.bf16.msra.mxu0 0
    %269 = vmatprep.subr.bf16.mxu0 0
    %270 = vmatpush1.bf16.msra.mxu0 0
    %271 = vmatprep.mubr.bf16.mxu0 0
    %272 = vmatmul.mubr.bf16.gmra.mrb[0].mxu0 %v46
    %v273 = vpop.f32.mrb[0].mxu0
    %v274 = vadd.f32 0.0, %v273
    %v275 = vpop.f32.mrb[0].mxu0
    %v276 = vadd.f32 0.0, %v275
    %v277 = vpop.f32.mrb[0].mxu0
    %v278 = vpop.f32.mrb[0].mxu0
    %279 = vdwg.mxu0
    %280 = vmatprep.subr.bf16.mxu0 %v178
    %281 = vmatpush1.bf16.msra.mxu0 %v177
    %282 = vmatprep.subr.bf16.mxu0 %v182
    %283 = vmatpush1.bf16.msra.mxu0 %v181
    %284 = vmatprep.subr.bf16.mxu0 %v186
    %285 = vmatpush1.bf16.msra.mxu0 %v185
    %286 = vmatprep.subr.bf16.mxu0 %v190
    %287 = vmatpush1.bf16.msra.mxu0 %v189
    %288 = vmatprep.subr.bf16.mxu0 %v194
    %289 = vmatpush1.bf16.msra.mxu0 %v193
    %290 = vmatprep.subr.bf16.mxu0 %v198
    %291 = vmatpush1.bf16.msra.mxu0 %v197
    %292 = vmatprep.subr.bf16.mxu0 %v202
    %293 = vmatpush1.bf16.msra.mxu0 %v201
    %294 = vmatprep.subr.bf16.mxu0 %v206
    %295 = vmatpush1.bf16.msra.mxu0 %v205
    %296 = vmatprep.subr.bf16.mxu0 0
    %297 = vmatpush1.bf16.msra.mxu0 0
    %298 = vmatprep.subr.bf16.mxu0 0
    %299 = vmatpush1.bf16.msra.mxu0 0
    %300 = vmatprep.subr.bf16.mxu0 0
    %301 = vmatpush1.bf16.msra.mxu0 0
    %302 = vmatprep.subr.bf16.mxu0 0
    %303 = vmatpush1.bf16.msra.mxu0 0
    %304 = vmatprep.subr.bf16.mxu0 0
    %305 = vmatpush1.bf16.msra.mxu0 0
    %306 = vmatprep.subr.bf16.mxu0 0
    %307 = vmatpush1.bf16.msra.mxu0 0
    %308 = vmatprep.subr.bf16.mxu0 0
    %309 = vmatpush1.bf16.msra.mxu0 0
    %310 = vmatprep.subr.bf16.mxu0 0
    %311 = vmatpush1.bf16.msra.mxu0 0
    %312 = vmatprep.mubr.bf16.mxu0 0
    %313 = vmatmul.mubr.bf16.gmra.mrb[0].mxu0 %v46
    %v314 = vpop.f32.mrb[0].mxu0
    %v315 = vadd.f32 0.0, %v314
    %v316 = vpop.f32.mrb[0].mxu0
    %v317 = vadd.f32 0.0, %v316
    %v318 = vpop.f32.mrb[0].mxu0
    %v319 = vpop.f32.mrb[0].mxu0
    %320 = vdwg.mxu0
    %v321 = vxor.u32 %v274, 2147483648
    %v322 = vmul.f32 %v321, 1.442695
    %v323 = vpow.pop %v322
    %v324 = vadd.f32 %v323, 1.0
    %v325 = vrcp.pop %v324
    %v326 = vmul.f32 1.0, %v325
    %v327 = vxor.u32 %v276, 2147483648
    %v328 = vmul.f32 %v327, 1.442695
    %v329 = vpow.pop %v328
    %v330 = vadd.f32 %v329, 1.0
    %v331 = vrcp.pop %v330
    %v332 = vmul.f32 1.0, %v331
    %v333 = vmul.f32 %v326, %v317
    %v334 = vadd.f32 %v315, %v333
    %v335 = vtanh.pop %v334
    %vm336 = vcmp.lt.s32.totalorder %v45, 50
    %v337 = vsel %vm336, %v43, 0.0
    %v338 = vsub.f32 1.0, %v332
    %v339 = vmul.f32 %v338, %v335
    %v340 = vmul.f32 %v332, %v337
    %v341 = vadd.f32 %v339, %v340
    %vm342 = vcmp.eq.s32.totalorder %v45, 127
    %v343 = vsel %vm342, 1.0, %v341
    %v344 = vpack.c.bf16 %v343, %v343
    %v345 = vld [vmem:[#allocation4] sm:$0xf]
    %v346 = vld [vmem:[#allocation4 + $0x4] sm:$0xf]
    %v347 = vld [vmem:[#allocation4 + $0x8] sm:$0xf]
    %v348 = vld [vmem:[#allocation4 + $0xc] sm:$0xf]
    %v349 = vld [vmem:[#allocation4 + $0x10] sm:$0xf]
    %v350 = vld [vmem:[#allocation4 + $0x14] sm:$0xf]
    %v351 = vld [vmem:[#allocation4 + $0x18] sm:$0xf]
    %v352 = vld [vmem:[#allocation4 + $0x1c] sm:$0xf]
    %v353 = vld [vmem:[#allocation4 + $0x20] sm:$0xf]
    %v354 = vld [vmem:[#allocation4 + $0x24] sm:$0xf]
    %v355 = vld [vmem:[#allocation4 + $0x28] sm:$0xf]
    %v356 = vld [vmem:[#allocation4 + $0x2c] sm:$0xf]
    %v357 = vld [vmem:[#allocation4 + $0x30] sm:$0xf]
    %v358 = vld [vmem:[#allocation4 + $0x34] sm:$0xf]
    %v359 = vld [vmem:[#allocation4 + $0x38] sm:$0xf]
    %v360 = vld [vmem:[#allocation4 + $0x3c] sm:$0xf]
    %v377 = vunpack.c.l.b16 %v345
    %v378 = vunpack.c.l.b16 %v346
    %v379 = vunpack.c.l.b16 %v347
    %v380 = vunpack.c.l.b16 %v348
    %v381 = vunpack.c.l.b16 %v349
    %v382 = vunpack.c.l.b16 %v350
    %v383 = vunpack.c.l.b16 %v351
    %v384 = vunpack.c.l.b16 %v352
    %v385 = vunpack.c.l.b16 %v353
    %v386 = vunpack.c.l.b16 %v354
    %v387 = vunpack.c.l.b16 %v355
    %v388 = vunpack.c.l.b16 %v356
    %v389 = vunpack.c.l.b16 %v357
    %v390 = vunpack.c.l.b16 %v358
    %v391 = vunpack.c.l.b16 %v359
    %v392 = vunpack.c.l.b16 %v360
    %v393 = vpack.c.b16 %v378, %v377
    %v394 = vpack.c.b16 %v380, %v379
    %v395 = vpack.c.b16 %v382, %v381
    %v396 = vpack.c.b16 %v384, %v383
    %v397 = vpack.c.b16 %v386, %v385
    %v398 = vpack.c.b16 %v388, %v387
    %v399 = vpack.c.b16 %v390, %v389
    %v400 = vpack.c.b16 %v392, %v391
    %409 = vmatprep.subr.bf16.mxu0 0
    %410 = vmatpush1.bf16.msra.mxu0 %v393
    %411 = vmatprep.subr.bf16.mxu0 0
    %412 = vmatpush1.bf16.msra.mxu0 %v394
    %413 = vmatprep.subr.bf16.mxu0 0
    %414 = vmatpush1.bf16.msra.mxu0 %v395
    %415 = vmatprep.subr.bf16.mxu0 0
    %416 = vmatpush1.bf16.msra.mxu0 %v396
    %417 = vmatprep.subr.bf16.mxu0 0
    %418 = vmatpush1.bf16.msra.mxu0 %v397
    %419 = vmatprep.subr.bf16.mxu0 0
    %420 = vmatpush1.bf16.msra.mxu0 %v398
    %421 = vmatprep.subr.bf16.mxu0 0
    %422 = vmatpush1.bf16.msra.mxu0 %v399
    %423 = vmatprep.subr.bf16.mxu0 0
    %424 = vmatpush1.bf16.msra.mxu0 %v400
    %425 = vmatprep.subr.bf16.mxu0 0
    %426 = vmatpush1.bf16.msra.mxu0 0
    %427 = vmatprep.subr.bf16.mxu0 0
    %428 = vmatpush1.bf16.msra.mxu0 0
    %429 = vmatprep.subr.bf16.mxu0 0
    %430 = vmatpush1.bf16.msra.mxu0 0
    %431 = vmatprep.subr.bf16.mxu0 0
    %432 = vmatpush1.bf16.msra.mxu0 0
    %433 = vmatprep.subr.bf16.mxu0 0
    %434 = vmatpush1.bf16.msra.mxu0 0
    %435 = vmatprep.subr.bf16.mxu0 0
    %436 = vmatpush1.bf16.msra.mxu0 0
    %437 = vmatprep.subr.bf16.mxu0 0
    %438 = vmatpush1.bf16.msra.mxu0 0
    %439 = vmatprep.subr.bf16.mxu0 0
    %440 = vmatpush1.bf16.msra.mxu0 0
    %441 = vmatprep.mubr.bf16.mxu0 0
    %442 = vmatmul.mubr.bf16.gmra.mrb[0].mxu0 %v344
    %v443 = vpop.f32.mrb[0].mxu0
    %v444 = vadd.f32 0.0, %v443
    %v445 = vpop.f32.mrb[0].mxu0
    %v446 = vpop.f32.mrb[0].mxu0
    %v447 = vpop.f32.mrb[0].mxu0
    %448 = vdwg.mxu0
    %vm449 = vcmp.ge.s32.totalorder %v45, 125
    %vm450 = vcmp.lt.s32.totalorder %v45, 127
    %vm451 = vmand %vm449, %vm450
    %v452 = vxor.u32 %v444, 2147483648
    %v453 = vmul.f32 %v452, 1.442695
    %v454 = vpow.pop %v453
    %v455 = vadd.f32 %v454, 1.0
    %v456 = vrcp.pop %v455
    %v457 = vmul.f32 1.0, %v456
    %v458 = vsel %vm451, %v457, %v444
    %v459 = vadd.f32 %v341, %v458
    %460 = vst [vmem:[%s3] sm:$0xff] %v459
    // Predicated region
    $region22: #{net_forward.1} parent=1 // pred_check
      _
    $region23: #{net_forward.1} parent=1 // pred_check_branch
      %462 = sbr.rel (0) target = $region25
    $region24: #{net_forward.1} parent=1 // pred_region
      _
    $region25: #{net_forward.1} parent=1 // pred_fallthru
      _
    // Predicated region
    $region26: #{net_forward.1} parent=1 // pred_check
      _
    $region27: #{net_forward.1} parent=1 // pred_check_branch
      %464 = sbr.rel (0) target = $region29
    $region28: #{net_forward.1} parent=1 // pred_region
      _
    $region29: #{net_forward.1} parent=1 // pred_fallthru
      _
    %465 = vsyncpa [#allocation3], 1
    %466 = vsyncpa [#allocation5], 1

</llo_original>
